<compile_context>
chip_gen: v5e
topology: v5e:2x2
jax: 0.10.0
libtpu: 0.0.40
codegen_flags: <defaults>
</compile_context>

<pallas_src>
import math

import jax
import jax.numpy as jnp
from jax.experimental import pallas as pl
from jax.experimental.pallas import tpu as pltpu

_LANES = 128
_TARGET_BLOCK_BYTES = 4 * 1024 * 1024   # ~4 MiB per array per block
_VMEM_LIMIT_BYTES = 48 * 1024 * 1024    # 4 arrays x 2 buffers x 4 MiB = 32 MiB working set


def _muladd_kernel(x_ref, y_ref, z_ref, o_ref):
    # Pure VPU elementwise over the current VMEM tile; accumulate in f32.
    x = x_ref[...].astype(jnp.float32)
    y = y_ref[...].astype(jnp.float32)
    z = z_ref[...].astype(jnp.float32)
    o_ref[...] = (3.0 * x + 2.5 * y + z).astype(o_ref.dtype)


def _sublane_multiple(dtype):
    itemsize = jnp.dtype(dtype).itemsize
    # 8 rows for 4-byte dtypes, 16 for 2-byte (bf16), 32 for 1-byte.
    return max(8, 32 // itemsize)


def _round_up(a, b):
    return ((a + b - 1) // b) * b


def mul_add(x, y, z):
    assert x.shape == y.shape == z.shape
    assert x.dtype == y.dtype == z.dtype
    orig_shape = x.shape
    dtype = x.dtype
    itemsize = jnp.dtype(dtype).itemsize

    total = math.prod(orig_shape) if orig_shape else 1
    sublane = _sublane_multiple(dtype)

    # Fallback: non-float dtypes, sizes that don't reshape cleanly to
    # (rows, 128), or inputs too small to pipeline (< 2 grid steps).
    # Fused XLA elementwise is already optimal there and avoids any pad/slice.
    if (not jnp.issubdtype(dtype, jnp.floating)
            or total % _LANES != 0
            or (total // _LANES) < 2 * sublane):
        return 3.0 * x + 2.5 * y + z

    rows = total // _LANES

    # Target ~4 MiB per array per block in a lane-dense (rows, 128) layout,
    # but cap block_rows so the grid has at least 2 steps (pipelining +
    # cross-TensorCore sharding on v7x).
    target_rows = _round_up(
        max(sublane, _TARGET_BLOCK_BYTES // (_LANES * itemsize)), sublane)
    max_block = max(sublane, ((rows // 2) // sublane) * sublane)
    block_rows = min(target_rows, max_block)

    grid_steps = pl.cdiv(rows, block_rows)   # last block may be partial; Pallas masks it

    def to2d(a):
        return a.reshape(rows, _LANES)       # pure bitcast, no copy

    x2, y2, z2 = to2d(x), to2d(y), to2d(z)

    spec = pl.BlockSpec((block_rows, _LANES), lambda i: (i, 0))

    out2 = pl.pallas_call(
        _muladd_kernel,
        out_shape=jax.ShapeDtypeStruct((rows, _LANES), dtype),
        grid=(grid_steps,),
        in_specs=[spec, spec, spec],
        out_specs=spec,
        compiler_params=pltpu.CompilerParams(
            dimension_semantics=("parallel",),
            vmem_limit_bytes=_VMEM_LIMIT_BYTES,
        ),
        cost_estimate=pl.CostEstimate(
            flops=3 * total,
            transcendentals=0,
            bytes_accessed=4 * total * itemsize,
        ),
    )(x2, y2, z2)

    return out2.reshape(orig_shape)


if __name__ == "__main__":
    key = jax.random.PRNGKey(0)
    kx, ky, kz = jax.random.split(key, 3)
    shape = (2, 4, 16, 16)  # NCHW, like the PyTorch module
    x = jax.random.normal(kx, shape, dtype=jnp.float32)
    y = jax.random.normal(ky, shape, dtype=jnp.float32)
    z = jax.random.normal(kz, shape, dtype=jnp.float32)

    out = mul_add(x, y, z)
    out = jax.block_until_ready(out)

    ref = 3.0 * x + 2.5 * y + z
    assert out.shape == shape
    assert jnp.allclose(out, ref, atol=1e-6, rtol=1e-6)
    print("KERNEL_OK")
</pallas_src>

<mosaic_0001>
module attributes {stable_mosaic.version = 11 : i64} {
  func.func @_muladd_kernel(%arg0: i32, %arg1: memref<8x128xf32, #tpu.memory_space<vmem>>, %arg2: memref<8x128xf32, #tpu.memory_space<vmem>>, %arg3: memref<8x128xf32, #tpu.memory_space<vmem>>, %arg4: memref<8x128xf32, #tpu.memory_space<vmem>>) attributes {dimension_semantics = [#tpu.dimension_semantics<parallel>], iteration_bounds = array<i64: 2>, scalar_prefetch = 0 : i64, scratch_operands = 0 : i64, tpu.core_type = #tpu.core_type<tc>, window_params = [{transform_indices = @transform_0, window_bounds = array<i64: 8, 128>}, {transform_indices = @transform_1, window_bounds = array<i64: 8, 128>}, {transform_indices = @transform_2, window_bounds = array<i64: 8, 128>}, {transform_indices = @transform_3, window_bounds = array<i64: 8, 128>}]} {
    %c0 = arith.constant 0 : index
    %c0_0 = arith.constant 0 : index
    %0 = vector.load %arg1[%c0, %c0_0] : memref<8x128xf32, #tpu.memory_space<vmem>>, vector<8x128xf32>
    %c0_1 = arith.constant 0 : index
    %c0_2 = arith.constant 0 : index
    %1 = vector.load %arg2[%c0_1, %c0_2] : memref<8x128xf32, #tpu.memory_space<vmem>>, vector<8x128xf32>
    %c0_3 = arith.constant 0 : index
    %c0_4 = arith.constant 0 : index
    %2 = vector.load %arg3[%c0_3, %c0_4] : memref<8x128xf32, #tpu.memory_space<vmem>>, vector<8x128xf32>
    %cst = arith.constant 3.000000e+00 : f32
    %3 = vector.broadcast %cst : f32 to vector<8x128xf32>
    %4 = arith.mulf %3, %0 : vector<8x128xf32>
    %cst_5 = arith.constant 2.500000e+00 : f32
    %5 = vector.broadcast %cst_5 : f32 to vector<8x128xf32>
    %6 = arith.mulf %5, %1 : vector<8x128xf32>
    %7 = arith.addf %4, %6 : vector<8x128xf32>
    %8 = arith.addf %7, %2 : vector<8x128xf32>
    %c0_6 = arith.constant 0 : index
    %c0_7 = arith.constant 0 : index
    %9 = vector.load %arg4[%c0_6, %c0_7] : memref<8x128xf32, #tpu.memory_space<vmem>>, vector<8x128xf32>
    tpu.vector_store %arg4[%c0_6, %c0_7], %8 {strides = array<i32>} : memref<8x128xf32, #tpu.memory_space<vmem>>, vector<8x128xf32>,
    return
  }
  func.func @transform_0(%arg0: i32) -> (i32, i32) {
    %c0_i32 = arith.constant 0 : i32
    %c0_i32_0 = arith.constant 0 : i32
    return %arg0, %c0_i32 : i32, i32
  }
  func.func @transform_1(%arg0: i32) -> (i32, i32) {
    %c0_i32 = arith.constant 0 : i32
    %c0_i32_0 = arith.constant 0 : i32
    return %arg0, %c0_i32 : i32, i32
  }
  func.func @transform_2(%arg0: i32) -> (i32, i32) {
    %c0_i32 = arith.constant 0 : i32
    %c0_i32_0 = arith.constant 0 : i32
    return %arg0, %c0_i32 : i32, i32
  }
  func.func @transform_3(%arg0: i32) -> (i32, i32) {
    %c0_i32 = arith.constant 0 : i32
    %c0_i32_0 = arith.constant 0 : i32
    return %arg0, %c0_i32 : i32, i32
  }
}

</mosaic_0001>

<llo_original>
// kernel: tpu_custom_call.1
$region0: #{tpu_custom_call.1}
  #allocation0 [shape = 'u32[]', space=smem, size = 0x4, offset = 0x4, fixed_abs, tag = 'smem constant byte address 0x4 - core index']
  #allocation1 [shape = 'u32[72,128]{1,0:T(1,128)}', space=vmem, size = 0x9000, scoped, tag = 'internal scratch']
  %s0 = inlined_call_operand.hbm [shape: f32[16,128], index: 0, kind: input, shape index: {}]
  %s1 = inlined_call_operand.hbm [shape: f32[16,128], index: 1, kind: input, shape index: {}]
  %s2 = inlined_call_operand.hbm [shape: f32[16,128], index: 2, kind: input, shape index: {}]
  %s3 = inlined_call_operand.hbm [shape: f32[16,128], index: 3, kind: output, shape index: {}]
  %s4 = sld [smem:[#allocation0]]
  $region57: #{tpu_custom_call.1} parent=0
    _
  %s6 = ssub.s32 1, %s4
  %s7 = scalar_select 0, %s6, %s4
  $region1: #{tpu_custom_call.1} parent=0
    #allocation2 [shape = 'u8[8192]{0}', space=vmem, size = 0x2000, scoped, tag = 'input window, operand 0']
    #allocation3 [shape = 's32[2]{0}', space=sflag, size = 0x8, scoped, tag = 'scoped memory for tpu_custom_call.1']
    #allocation4 [shape = 's32[2]{0}', space=sflag, size = 0x8, scoped, tag = 'scoped memory for tpu_custom_call.1']
    #allocation5 [shape = 'u8[8192]{0}', space=vmem, size = 0x2000, scoped, tag = 'input window, operand 1']
    #allocation6 [shape = 's32[2]{0}', space=sflag, size = 0x8, scoped, tag = 'scoped memory for tpu_custom_call.1']
    #allocation7 [shape = 'u8[8192]{0}', space=vmem, size = 0x2000, scoped, tag = 'input window, operand 2']
    #allocation8 [shape = 'u8[8192]{0}', space=vmem, size = 0x2000, scoped, tag = 'output window, operand 0']
    %8 = vsyncpa [#allocation3], 0
    %s9 = scalar_lea.sflag [#allocation3], 1
    %10 = vsyncpa %s9, 0
    %11 = vsyncpa [#allocation6], 0
    %s12 = scalar_lea.sflag [#allocation6], 1
    %13 = vsyncpa %s12, 0
    %14 = vsyncpa [#allocation4], 0
    %s15 = scalar_lea.sflag [#allocation4], 1
    %16 = vsyncpa %s15, 0
    loop: start=0, step=1, limit=4
    $region2: #{tpu_custom_call.1} parent=1 // loop_pre_header
      _
    $region3: #{tpu_custom_call.1} parent=1 // loop_header
      %s18 = sphi 0, %s22
      %p19 = scmp.ge.s32.totalorder %s18, 4
      %s28 = sphi 0, %s30
      %s31 = sphi 0, %s28
      %s32 = sphi 0, %s31
      %s48 = sphi 0, %s32
      %s54 = sphi 0, %s56
      %s57 = sphi 0, %s54
      %s58 = sphi 0, %s57
      %s74 = sphi 0, %s58
      %s80 = sphi 0, %s82
      %s83 = sphi 0, %s80
      %s84 = sphi 0, %s83
      %s100 = sphi 0, %s84
      %s106 = sphi 0, %s108
      %s109 = sphi 0, %s106
      %s110 = sphi 0, %s109
      %s126 = sphi 0, %s110
    $region4: #{tpu_custom_call.1} parent=1 // loop_header_branch
      %21 = sbr.rel (%p19) target = $region8
    $region5: #{tpu_custom_call.1} parent=1 // loop_body
      %s23 = ssub.s32 %s18, 1
      %s24 = ssub.s32 %s18, 2
      %s25 = sadd.s32 %s18, 1
      %s26 = ssub.s32 %s18, %s25
      %p27 = scmp.eq.s32.totalorder %s26, 0
      %s29 = sadd.s32 %s28, 1
      %s30 = scalar_select %p27, %s28, %s29
      %p33 = pneg %p27
      %p34 = scmp.eq.s32.totalorder %s18, 1
      %p35 = por %p33, %p34
      %p36 = scmp.ne.s32.totalorder %s28, %s31
      %p37 = scmp.eq.s32.totalorder %s18, 0
      %p38 = por %p36, %p37
      %p39 = scmp.ne.s32.totalorder %s28, %s31
      %p40 = scmp.eq.s32.totalorder %s23, 1
      %p41 = por %p39, %p40
      %p42 = scmp.ne.s32.totalorder %s31, %s32
      %p43 = scmp.eq.s32.totalorder %s23, 0
      %p44 = por %p42, %p43
      %p45 = scmp.ne.s32.totalorder %s31, %s32
      %p46 = scmp.eq.s32.totalorder %s24, 1
      %p47 = por %p45, %p46
      %p49 = scmp.ne.s32.totalorder %s32, %s48
      %p50 = scmp.eq.s32.totalorder %s24, 0
      %p51 = por %p49, %p50
      %s52 = ssub.s32 %s18, %s25
      %p53 = scmp.eq.s32.totalorder %s52, 0
      %s55 = sadd.s32 %s54, 1
      %s56 = scalar_select %p53, %s54, %s55
      %p59 = pneg %p53
      %p60 = scmp.eq.s32.totalorder %s18, 1
      %p61 = por %p59, %p60
      %p62 = scmp.ne.s32.totalorder %s54, %s57
      %p63 = scmp.eq.s32.totalorder %s18, 0
      %p64 = por %p62, %p63
      %p65 = scmp.ne.s32.totalorder %s54, %s57
      %p66 = scmp.eq.s32.totalorder %s23, 1
      %p67 = por %p65, %p66
      %p68 = scmp.ne.s32.totalorder %s57, %s58
      %p69 = scmp.eq.s32.totalorder %s23, 0
      %p70 = por %p68, %p69
      %p71 = scmp.ne.s32.totalorder %s57, %s58
      %p72 = scmp.eq.s32.totalorder %s24, 1
      %p73 = por %p71, %p72
      %p75 = scmp.ne.s32.totalorder %s58, %s74
      %p76 = scmp.eq.s32.totalorder %s24, 0
      %p77 = por %p75, %p76
      %s78 = ssub.s32 %s18, %s25
      %p79 = scmp.eq.s32.totalorder %s78, 0
      %s81 = sadd.s32 %s80, 1
      %s82 = scalar_select %p79, %s80, %s81
      %p85 = pneg %p79
      %p86 = scmp.eq.s32.totalorder %s18, 1
      %p87 = por %p85, %p86
      %p88 = scmp.ne.s32.totalorder %s80, %s83
      %p89 = scmp.eq.s32.totalorder %s18, 0
      %p90 = por %p88, %p89
      %p91 = scmp.ne.s32.totalorder %s80, %s83
      %p92 = scmp.eq.s32.totalorder %s23, 1
      %p93 = por %p91, %p92
      %p94 = scmp.ne.s32.totalorder %s83, %s84
      %p95 = scmp.eq.s32.totalorder %s23, 0
      %p96 = por %p94, %p95
      %p97 = scmp.ne.s32.totalorder %s83, %s84
      %p98 = scmp.eq.s32.totalorder %s24, 1
      %p99 = por %p97, %p98
      %p101 = scmp.ne.s32.totalorder %s84, %s100
      %p102 = scmp.eq.s32.totalorder %s24, 0
      %p103 = por %p101, %p102
      %s104 = ssub.s32 %s18, %s25
      %p105 = scmp.eq.s32.totalorder %s104, 0
      %s107 = sadd.s32 %s106, 1
      %s108 = scalar_select %p105, %s106, %s107
      %p111 = pneg %p105
      %p112 = scmp.eq.s32.totalorder %s18, 1
      %p113 = por %p111, %p112
      %p114 = scmp.ne.s32.totalorder %s106, %s109
      %p115 = scmp.eq.s32.totalorder %s18, 0
      %p116 = por %p114, %p115
      %p117 = scmp.ne.s32.totalorder %s106, %s109
      %p118 = scmp.eq.s32.totalorder %s23, 1
      %p119 = por %p117, %p118
      %p120 = scmp.ne.s32.totalorder %s109, %s110
      %p121 = scmp.eq.s32.totalorder %s23, 0
      %p122 = por %p120, %p121
      %p123 = scmp.ne.s32.totalorder %s109, %s110
      %p124 = scmp.eq.s32.totalorder %s24, 1
      %p125 = por %p123, %p124
      %p127 = scmp.ne.s32.totalorder %s110, %s126
      %p128 = scmp.eq.s32.totalorder %s24, 0
      %p129 = por %p127, %p128
      %p130 = scmp.le.s32.totalorder 1, %s18
      %p131 = scmp.lt.s32.totalorder %s18, 3
      %p132 = pnand %p130, %p131
      %p133 = pneg %p132
      // Predicated region
      $region9: #{tpu_custom_call.1} parent=5 // pred_check
        _
      $region10: #{tpu_custom_call.1} parent=5 // pred_check_branch
        %135 = sbr.rel (%p132) target = $region12
      $region11: #{tpu_custom_call.1} parent=5 // pred_region
        %s136 = ssub.s32 %s18, 1
      $region12: #{tpu_custom_call.1} parent=5 // pred_fallthru
        _
      %p137 = scmp.lt.s32.totalorder %s18, 2
      // Predicated region
      $region13: #{tpu_custom_call.1} parent=5 // pred_check
        %p138 = pneg %p137
      $region14: #{tpu_custom_call.1} parent=5 // pred_check_branch
        %140 = sbr.rel (%p138) target = $region16
      $region15: #{tpu_custom_call.1} parent=5 // pred_region
        // Predicated region
        $region17: #{tpu_custom_call.1} parent=15 // pred_check
          %p141 = pneg %p38
        $region18: #{tpu_custom_call.1} parent=15 // pred_check_branch
          %143 = sbr.rel (%p141) target = $region20
        $region19: #{tpu_custom_call.1} parent=15 // pred_region
          %s144 = sand.u32 %s28, 1
          %s145 = scalar_lea.sflag [#allocation3], %s144
          %s146 = sand.u32 %s28, 1
          %s147 = smul.addr %s146, 8
          %s148 = scalar_lea.vmem [#allocation2], %s147
          %150 = vsyncadd %s145, 0
          %s151 = smul.addr %s18, 8
          %s152 = scalar_lea.hbm %s0, %s151
          %s154 = sshll.u32 %s152, 4
          %s155 = int_to_ptr.hbm [resolvable:$true] %s154
          %s156 = sshll.u32 %s148, 4
          %s157 = int_to_ptr.vmem [resolvable:$true] %s156
          %159 = dma.hbm_to_vmem [thread:$0]  %s155, 128, %s157, %s145
        $region20: #{tpu_custom_call.1} parent=15 // pred_fallthru
          _
        // Predicated region
        $region21: #{tpu_custom_call.1} parent=15 // pred_check
          %p160 = pneg %p64
        $region22: #{tpu_custom_call.1} parent=15 // pred_check_branch
          %162 = sbr.rel (%p160) target = $region24
        $region23: #{tpu_custom_call.1} parent=15 // pred_region
          %s163 = sand.u32 %s18, 1
          %s164 = scalar_lea.sflag [#allocation6], %s163
          %s165 = sand.u32 %s54, 1
          %s166 = smul.addr %s165, 8
          %s167 = scalar_lea.vmem [#allocation5], %s166
          %169 = vsyncadd %s164, 0
          %s170 = smul.addr %s18, 8
          %s171 = scalar_lea.hbm %s1, %s170
          %s173 = sshll.u32 %s171, 4
          %s174 = int_to_ptr.hbm [resolvable:$true] %s173
          %s175 = sshll.u32 %s167, 4
          %s176 = int_to_ptr.vmem [resolvable:$true] %s175
          %178 = dma.hbm_to_vmem [thread:$0]  %s174, 128, %s176, %s164
        $region24: #{tpu_custom_call.1} parent=15 // pred_fallthru
          _
        // Predicated region
        $region25: #{tpu_custom_call.1} parent=15 // pred_check
          %p179 = pneg %p90
        $region26: #{tpu_custom_call.1} parent=15 // pred_check_branch
          %181 = sbr.rel (%p179) target = $region28
        $region27: #{tpu_custom_call.1} parent=15 // pred_region
          %s182 = sand.u32 %s18, 1
          %s183 = scalar_lea.sflag [#allocation6], %s182
          %s184 = sand.u32 %s80, 1
          %s185 = smul.addr %s184, 8
          %s186 = scalar_lea.vmem [#allocation7], %s185
          %188 = vsyncadd %s183, 0
          %s189 = smul.addr %s18, 8
          %s190 = scalar_lea.hbm %s2, %s189
          %s192 = sshll.u32 %s190, 4
          %s193 = int_to_ptr.hbm [resolvable:$true] %s192
          %s194 = sshll.u32 %s186, 4
          %s195 = int_to_ptr.vmem [resolvable:$true] %s194
          %197 = dma.hbm_to_vmem [thread:$0]  %s193, 128, %s195, %s183
        $region28: #{tpu_custom_call.1} parent=15 // pred_fallthru
          _
      $region16: #{tpu_custom_call.1} parent=5 // pred_fallthru
        _
      %p198 = scmp.le.s32.totalorder 1, %s18
      %p199 = scmp.lt.s32.totalorder %s18, 3
      %p200 = pnand %p198, %p199
      %p201 = pneg %p200
      // Predicated region
      $region29: #{tpu_custom_call.1} parent=5 // pred_check
        _
      $region30: #{tpu_custom_call.1} parent=5 // pred_check_branch
        %203 = sbr.rel (%p200) target = $region32
      $region31: #{tpu_custom_call.1} parent=5 // pred_region
        %s204 = ssub.s32 %s18, 1
        %s205 = sand.u32 %s31, 1
        %s206 = scalar_lea.sflag [#allocation3], %s205
        %s207 = sand.u32 %s31, 1
        %s208 = smul.addr %s207, 8
        %s209 = scalar_lea.vmem [#allocation2], %s208
        // Predicated region
        $region33: #{tpu_custom_call.1} parent=31 // pred_check
          %p210 = pneg %p44
        $region34: #{tpu_custom_call.1} parent=31 // pred_check_branch
          %212 = sbr.rel (%p210) target = $region36
        $region35: #{tpu_custom_call.1} parent=31 // pred_region
          %214 = dma.done %s206, 128
        $region36: #{tpu_custom_call.1} parent=31 // pred_fallthru
          _
        %s215 = sand.u32 %s23, 1
        %s216 = scalar_lea.sflag [#allocation6], %s215
        %s217 = sand.u32 %s57, 1
        %s218 = smul.addr %s217, 8
        %s219 = scalar_lea.vmem [#allocation5], %s218
        // Predicated region
        $region37: #{tpu_custom_call.1} parent=31 // pred_check
          %p220 = pneg %p70
        $region38: #{tpu_custom_call.1} parent=31 // pred_check_branch
          %222 = sbr.rel (%p220) target = $region40
        $region39: #{tpu_custom_call.1} parent=31 // pred_region
          %224 = dma.done %s216, 128
        $region40: #{tpu_custom_call.1} parent=31 // pred_fallthru
          _
        %s225 = sand.u32 %s23, 1
        %s226 = scalar_lea.sflag [#allocation6], %s225
        %s227 = sand.u32 %s83, 1
        %s228 = smul.addr %s227, 8
        %s229 = scalar_lea.vmem [#allocation7], %s228
        // Predicated region
        $region41: #{tpu_custom_call.1} parent=31 // pred_check
          %p230 = pneg %p96
        $region42: #{tpu_custom_call.1} parent=31 // pred_check_branch
          %232 = sbr.rel (%p230) target = $region44
        $region43: #{tpu_custom_call.1} parent=31 // pred_region
          %234 = dma.done %s226, 128
        $region44: #{tpu_custom_call.1} parent=31 // pred_fallthru
          _
        %s235 = sand.u32 %s31, 1
        %s236 = scalar_lea.sflag [#allocation3], %s235
        %s237 = sand.u32 %s31, 1
        %s238 = smul.addr %s237, 8
        %s239 = scalar_lea.vmem [#allocation2], %s238
        %p240 = pneg %p44
        %p241 = pneg %p41
        %s242 = sand.u32 %s23, 1
        %s243 = scalar_lea.sflag [#allocation6], %s242
        %s244 = sand.u32 %s57, 1
        %s245 = smul.addr %s244, 8
        %s246 = scalar_lea.vmem [#allocation5], %s245
        %p247 = pneg %p70
        %p248 = pneg %p67
        %s249 = sand.u32 %s23, 1
        %s250 = scalar_lea.sflag [#allocation6], %s249
        %s251 = sand.u32 %s83, 1
        %s252 = smul.addr %s251, 8
        %s253 = scalar_lea.vmem [#allocation7], %s252
        %p254 = pneg %p96
        %p255 = pneg %p93
        %p256 = pneg %p122
        %p257 = pneg %p119
        %s258 = sand.u32 %s109, 1
        %s259 = scalar_lea.sflag [#allocation4], %s258
        %s260 = sand.u32 %s109, 1
        %s261 = smul.addr %s260, 8
        %s262 = scalar_lea.vmem [#allocation8], %s261
        %v263 = vld [vmem:[%s209] sm:$0xff]
        %v264 = vld [vmem:[%s219] sm:$0xff]
        %v265 = vld [vmem:[%s229] sm:$0xff]
        %v266 = vmul.f32 %v263, 3.0
        %v267 = vmul.f32 %v264, 2.5
        %v268 = vadd.f32 %v266, %v267
        %v269 = vadd.f32 %v268, %v265
        %270 = vst [vmem:[%s262] sm:$0xff] %v269
        %s271 = sand.u32 %s109, 1
        %s272 = scalar_lea.sflag [#allocation4], %s271
        %s273 = sand.u32 %s109, 1
        %s274 = smul.addr %s273, 8
        %s275 = scalar_lea.vmem [#allocation8], %s274
        // Predicated region
        $region45: #{tpu_custom_call.1} parent=31 // pred_check
          %p276 = pneg %p119
        $region46: #{tpu_custom_call.1} parent=31 // pred_check_branch
          %278 = sbr.rel (%p276) target = $region48
        $region47: #{tpu_custom_call.1} parent=31 // pred_region
          %280 = vsyncadd %s272, 0
          %s281 = smul.addr %s23, 8
          %s282 = scalar_lea.hbm %s3, %s281
          %s284 = sshll.u32 %s275, 4
          %s285 = int_to_ptr.vmem [resolvable:$true] %s284
          %s286 = sshll.u32 %s282, 4
          %s287 = int_to_ptr.hbm [resolvable:$true] %s286
          %289 = dma.vmem_to_hbm [thread:$0]  %s285, 128, %s287, %s272
        $region48: #{tpu_custom_call.1} parent=31 // pred_fallthru
          _
      $region32: #{tpu_custom_call.1} parent=5 // pred_fallthru
        _
      %p290 = scmp.le.s32.totalorder 2, %s18
      // Predicated region
      $region49: #{tpu_custom_call.1} parent=5 // pred_check
        %p291 = pneg %p290
      $region50: #{tpu_custom_call.1} parent=5 // pred_check_branch
        %293 = sbr.rel (%p291) target = $region52
      $region51: #{tpu_custom_call.1} parent=5 // pred_region
        %s294 = ssub.s32 %s18, 2
        // Predicated region
        $region53: #{tpu_custom_call.1} parent=51 // pred_check
          %p295 = pneg %p125
        $region54: #{tpu_custom_call.1} parent=51 // pred_check_branch
          %297 = sbr.rel (%p295) target = $region56
        $region55: #{tpu_custom_call.1} parent=51 // pred_region
          %s298 = sand.u32 %s110, 1
          %s299 = scalar_lea.sflag [#allocation4], %s298
          %s300 = sand.u32 %s110, 1
          %s301 = smul.addr %s300, 8
          %s302 = scalar_lea.vmem [#allocation8], %s301
          %304 = dma.done %s299, 128
        $region56: #{tpu_custom_call.1} parent=51 // pred_fallthru
          _
      $region52: #{tpu_custom_call.1} parent=5 // pred_fallthru
        _
    $region6: #{tpu_custom_call.1} parent=1 // loop_footer
      %s22 = sadd.s32 1, %s18
    $region7: #{tpu_custom_call.1} parent=1 // loop_footer_branch
      %17 = sbr.rel target = $region3
    $region8: #{tpu_custom_call.1} parent=1 // loop_exit
      _
    %305 = vsyncpa [#allocation3], 1
    %s306 = scalar_lea.sflag [#allocation3], 1
    %307 = vsyncpa %s306, 1
    %308 = vsyncpa [#allocation6], 1
    %s309 = scalar_lea.sflag [#allocation6], 1
    %310 = vsyncpa %s309, 1
    %311 = vsyncpa [#allocation4], 1
    %s312 = scalar_lea.sflag [#allocation4], 1
    %313 = vsyncpa %s312, 1

</llo_original>
